<compile_context>
chip_gen: v7x
topology: tpu7x:2x2x1
jax: 0.10.0
libtpu: 0.0.40
codegen_flags: <defaults>
</compile_context>

<pallas_src>
import jax
import jax.numpy as jnp
from jax.experimental import pallas as pl
from jax.experimental.pallas import tpu as pltpu

NEG_SLOPE = 0.01  # PyTorch nn.LeakyReLU default


def _leaky_relu(x):
    # mul + max instead of compare + select: halves VALU ops in the epilogue.
    return jnp.maximum(x, NEG_SLOPE * x)


def _round_up(x, m):
    return ((x + m - 1) // m) * m


def expr_decoder_kernel(x_ref, w1_ref, b1_ref, w2_ref, b2_ref, w3_ref, b3_ref,
                        o_ref):
    # x_ref: (tm, d) bf16 ; w1/w2: (d, d) bf16 ; b1/b2/w3: (1, d) f32
    # w3_ref is the (d, 1) weight stored as a row vector ; b3_ref: (1,) in SMEM
    x = x_ref[...]
    h1 = jnp.dot(x, w1_ref[...], preferred_element_type=jnp.float32)
    h1 = _leaky_relu(h1 + b1_ref[...])                       # f32 (tm, d)
    h2 = jnp.dot(h1.astype(w2_ref.dtype), w2_ref[...],
                 preferred_element_type=jnp.float32)
    h2 = _leaky_relu(h2 + b2_ref[...])                       # f32 (tm, d)
    # Final 1-feature projection as a VPU mul + reduce (keeps output lane-dense
    # and leaves the MXU entirely to the two (tm,d)@(d,d) GEMMs).
    out = jnp.sum(h2 * w3_ref[...], axis=-1) + b3_ref[0]     # (tm,)
    o_ref[...] = out.reshape(1, 1, -1).astype(o_ref.dtype)


def _pallas_forward(x2d_bf, w1, b1, w2, b2, w3_row, b3, *, tm,
                    single_buffer_weights):
    m_pad, d_pad = x2d_bf.shape
    n_tiles = m_pad // tm

    const_kwargs = (dict(pipeline_mode=pl.Buffered(1))
                    if single_buffer_weights else {})

    # Rough VMEM budget: double-buffered x/out tiles, weights (single or
    # double buffered), f32 intermediates; clamp to v7x's 64 MiB physical VMEM.
    wbuf = 1 if single_buffer_weights else 2
    needed = (2 * tm * d_pad * 2                  # x tiles (bf16, double buf)
              + 2 * tm * 4                        # out tiles (f32, double buf)
              + wbuf * (2 * d_pad * d_pad * 2     # W1, W2 (bf16)
                        + 3 * d_pad * 4)          # b1, b2, w3 row (f32)
              + 4 * tm * d_pad * 4)               # live f32 h1/h2 values
    vmem_limit = int(min(64 * 2**20, max(2 * needed, 32 * 2**20)))

    in_specs = [
        pl.BlockSpec((tm, d_pad), lambda i: (i, 0)),                     # x rows
        pl.BlockSpec((d_pad, d_pad), lambda i: (0, 0), **const_kwargs),  # W1
        pl.BlockSpec((1, d_pad), lambda i: (0, 0), **const_kwargs),      # b1
        pl.BlockSpec((d_pad, d_pad), lambda i: (0, 0), **const_kwargs),  # W2
        pl.BlockSpec((1, d_pad), lambda i: (0, 0), **const_kwargs),      # b2
        pl.BlockSpec((1, d_pad), lambda i: (0, 0), **const_kwargs),      # W3 row
        pl.BlockSpec(memory_space=pltpu.MemorySpace.SMEM),               # b3
    ]
    out_specs = pl.BlockSpec((1, 1, tm), lambda i: (i, 0, 0))  # lane-dense rows

    return pl.pallas_call(
        expr_decoder_kernel,
        out_shape=jax.ShapeDtypeStruct((n_tiles, 1, tm), jnp.float32),
        grid_spec=pltpu.PrefetchScalarGridSpec(
            num_scalar_prefetch=0,
            grid=(n_tiles,),
            in_specs=in_specs,
            out_specs=out_specs,
        ),
        compiler_params=pltpu.CompilerParams(
            dimension_semantics=("parallel",),   # megacore sharding of the row grid
            vmem_limit_bytes=vmem_limit),
    )(x2d_bf, w1, b1, w2, b2, w3_row, b3)


def expr_decoder_forward(x, params, *, tm=None):
    """x: (B, S, d_model) -> dict(pred=(B, S))."""
    B, S, d_model = x.shape
    w1, b1, w2, b2, w3_row, b3 = params
    d_in = w1.shape[0]
    assert d_in == d_model  # use_batch_labels=False

    M = B * S

    # Row tile: 512 (multiple of 256, MXU-friendly) for realistic M, shrunk
    # for toy shapes so the single tile still satisfies layout constraints.
    if tm is None:
        tm = 512 if M > 512 else _round_up(M, 8)
    assert tm % 8 == 0
    M_pad = _round_up(M, tm)
    if M_pad > tm:
        assert tm % 128 == 0, "multi-tile grids need a 128-multiple row tile"

    # Pad features to a multiple of 128 for full vreg-lane / MXU occupancy.
    d_pad = _round_up(d_model, 128)

    x2d = x.reshape(M, d_model)
    x2d = jnp.pad(x2d, ((0, M_pad - M), (0, d_pad - d_model)))

    def pad2(a, r, c):
        return jnp.pad(a, ((0, r - a.shape[0]), (0, c - a.shape[1])))

    # bf16 MXU inputs (f32 accumulation inside the kernel); biases stay f32.
    w1p = pad2(w1, d_pad, d_pad).astype(jnp.bfloat16)
    w2p = pad2(w2, d_pad, d_pad).astype(jnp.bfloat16)
    b1p = pad2(b1, 1, d_pad)
    b2p = pad2(b2, 1, d_pad)
    w3p = pad2(w3_row, 1, d_pad)
    x2d_bf = x2d.astype(jnp.bfloat16)

    try:
        out = _pallas_forward(x2d_bf, w1p, b1p, w2p, b2p, w3p, b3,
                              tm=tm, single_buffer_weights=True)
    except Exception:
        # pl.Buffered(1) single-buffering unsupported in this build -> fall
        # back to default double-buffered weight blocks (correctness identical).
        out = _pallas_forward(x2d_bf, w1p, b1p, w2p, b2p, w3p, b3,
                              tm=tm, single_buffer_weights=False)

    pred = out.reshape(M_pad)[:M].reshape(B, S)  # squeeze(-1) + drop row pad
    return dict(pred=pred)


def init_params(key, d_model, dtype=jnp.float32):
    """Synthetic params matching nn.Linear fan-in init; weights stored as
    (in, out) so the kernel computes x @ W; the last layer's (d_model, 1)
    weight is stored as a (1, d_model) row vector."""
    ks = jax.random.split(key, 6)
    d_in = d_model  # use_batch_labels=False

    def uinit(k, fan_in, shape):
        bound = 1.0 / jnp.sqrt(fan_in)
        return jax.random.uniform(k, shape, dtype, -bound, bound)

    w1 = uinit(ks[0], d_in, (d_in, d_model))
    b1 = uinit(ks[1], d_in, (1, d_model))
    w2 = uinit(ks[2], d_model, (d_model, d_model))
    b2 = uinit(ks[3], d_model, (1, d_model))
    w3_row = uinit(ks[4], d_model, (1, d_model))
    b3 = uinit(ks[5], d_model, (1,))
    return (w1, b1, w2, b2, w3_row, b3)


def _reference_forward(x, params):
    """Pure-f32 JAX reference matching the PyTorch module."""
    w1, b1, w2, b2, w3_row, b3 = params
    h = _leaky_relu(x @ w1 + b1[0])
    h = _leaky_relu(h @ w2 + b2[0])
    return h @ w3_row[0] + b3[0]


if __name__ == "__main__":
    B, S, d_model = 2, 8, 32
    key = jax.random.PRNGKey(0)
    kx, kp = jax.random.split(key)
    x = jax.random.normal(kx, (B, S, d_model), jnp.float32)
    params = init_params(kp, d_model)

    out = expr_decoder_forward(x, params)
    pred = jax.block_until_ready(out["pred"])

    ref = _reference_forward(x, params)
    assert pred.shape == (B, S)
    # bf16 MXU inputs with f32 accumulation -> loose tolerance vs the f32 ref.
    max_err = float(jnp.max(jnp.abs(pred - ref)))
    assert jnp.allclose(pred, ref, atol=5e-2, rtol=5e-2), max_err
    print("KERNEL_OK")
</pallas_src>

<mosaic_0001>
module attributes {stable_mosaic.version = 11 : i64} {
  func.func @expr_decoder_kernel(%arg0: i32, %arg1: memref<16x128xbf16, #tpu.memory_space<vmem>>, %arg2: memref<128x128xbf16, #tpu.memory_space<vmem>>, %arg3: memref<1x128xf32, #tpu.memory_space<vmem>>, %arg4: memref<128x128xbf16, #tpu.memory_space<vmem>>, %arg5: memref<1x128xf32, #tpu.memory_space<vmem>>, %arg6: memref<1x128xf32, #tpu.memory_space<vmem>>, %arg7: memref<1xf32, #tpu.memory_space<smem>>, %arg8: memref<1x1x16xf32, #tpu.memory_space<vmem>>) attributes {dimension_semantics = [#tpu.dimension_semantics<parallel>], iteration_bounds = array<i64: 1>, scalar_prefetch = 0 : i64, scratch_operands = 0 : i64, tpu.core_type = #tpu.core_type<tc>, window_params = [{transform_indices = @transform_0, window_bounds = array<i64: 16, 128>}, {pipeline_mode = #tpu.pipeline_mode<synchronous>, transform_indices = @transform_1, window_bounds = array<i64: 128, 128>}, {pipeline_mode = #tpu.pipeline_mode<synchronous>, transform_indices = @transform_2, window_bounds = array<i64: 1, 128>}, {pipeline_mode = #tpu.pipeline_mode<synchronous>, transform_indices = @transform_3, window_bounds = array<i64: 128, 128>}, {pipeline_mode = #tpu.pipeline_mode<synchronous>, transform_indices = @transform_4, window_bounds = array<i64: 1, 128>}, {pipeline_mode = #tpu.pipeline_mode<synchronous>, transform_indices = @transform_5, window_bounds = array<i64: 1, 128>}, {transform_indices = @transform_6, window_bounds = array<i64: 1>}, {transform_indices = @transform_7, window_bounds = array<i64: 1, 1, 16>}]} {
    %c0 = arith.constant 0 : index
    %c0_0 = arith.constant 0 : index
    %0 = vector.load %arg1[%c0, %c0_0] : memref<16x128xbf16, #tpu.memory_space<vmem>>, vector<16x128xbf16>
    %c0_1 = arith.constant 0 : index
    %c0_2 = arith.constant 0 : index
    %1 = vector.load %arg2[%c0_1, %c0_2] : memref<128x128xbf16, #tpu.memory_space<vmem>>, vector<128x128xbf16>
    %cst = arith.constant dense<0.000000e+00> : vector<16x128xf32>
    %2 = tpu.matmul %0, %1, %cst {dimension_numbers = #tpu.dot_dimension_numbers<[1], [0], [0], [1], [0, 0, 1, 1], [], []>} : vector<16x128xbf16>, vector<128x128xbf16>, vector<16x128xf32> -> vector<16x128xf32>
    %c0_3 = arith.constant 0 : index
    %c0_4 = arith.constant 0 : index
    %3 = vector.load %arg3[%c0_3, %c0_4] : memref<1x128xf32, #tpu.memory_space<vmem>>, vector<1x128xf32>
    %4 = vector.broadcast %3 : vector<1x128xf32> to vector<16x128xf32>
    %5 = arith.addf %2, %4 : vector<16x128xf32>
    %cst_5 = arith.constant 0.00999999977 : f32
    %6 = vector.broadcast %cst_5 : f32 to vector<16x128xf32>
    %7 = arith.mulf %6, %5 : vector<16x128xf32>
    %8 = arith.maximumf %5, %7 : vector<16x128xf32>
    %9 = arith.truncf %8 : vector<16x128xf32> to vector<16x128xbf16>
    %c0_6 = arith.constant 0 : index
    %c0_7 = arith.constant 0 : index
    %10 = vector.load %arg4[%c0_6, %c0_7] : memref<128x128xbf16, #tpu.memory_space<vmem>>, vector<128x128xbf16>
    %cst_8 = arith.constant dense<0.000000e+00> : vector<16x128xf32>
    %11 = tpu.matmul %9, %10, %cst_8 {dimension_numbers = #tpu.dot_dimension_numbers<[1], [0], [0], [1], [0, 0, 1, 1], [], []>} : vector<16x128xbf16>, vector<128x128xbf16>, vector<16x128xf32> -> vector<16x128xf32>
    %c0_9 = arith.constant 0 : index
    %c0_10 = arith.constant 0 : index
    %12 = vector.load %arg5[%c0_9, %c0_10] : memref<1x128xf32, #tpu.memory_space<vmem>>, vector<1x128xf32>
    %13 = vector.broadcast %12 : vector<1x128xf32> to vector<16x128xf32>
    %14 = arith.addf %11, %13 : vector<16x128xf32>
    %cst_11 = arith.constant 0.00999999977 : f32
    %15 = vector.broadcast %cst_11 : f32 to vector<16x128xf32>
    %16 = arith.mulf %15, %14 : vector<16x128xf32>
    %17 = arith.maximumf %14, %16 : vector<16x128xf32>
    %c0_12 = arith.constant 0 : index
    %c0_13 = arith.constant 0 : index
    %18 = vector.load %arg6[%c0_12, %c0_13] : memref<1x128xf32, #tpu.memory_space<vmem>>, vector<1x128xf32>
    %19 = vector.broadcast %18 : vector<1x128xf32> to vector<16x128xf32>
    %20 = arith.mulf %17, %19 : vector<16x128xf32>
    %cst_14 = arith.constant dense<0.000000e+00> : vector<16xf32>
    %21 = vector.multi_reduction <add>, %20, %cst_14 [1] : vector<16x128xf32> to vector<16xf32>
    %c0_15 = arith.constant 0 : index
    %22 = memref.load %arg7[%c0_15] : memref<1xf32, #tpu.memory_space<smem>>
    %23 = vector.broadcast %22 : f32 to vector<16xf32>
    %24 = arith.addf %21, %23 : vector<16xf32>
    %25 = vector.shape_cast %24 : vector<16xf32> to vector<1x1x16xf32>
    %c0_16 = arith.constant 0 : index
    %c0_17 = arith.constant 0 : index
    %c0_18 = arith.constant 0 : index
    %26 = vector.load %arg8[%c0_16, %c0_17, %c0_18] : memref<1x1x16xf32, #tpu.memory_space<vmem>>, vector<1x1x16xf32>
    tpu.vector_store %arg8[%c0_16, %c0_17, %c0_18], %25 {strides = array<i32>} : memref<1x1x16xf32, #tpu.memory_space<vmem>>, vector<1x1x16xf32>,
    return
  }
  func.func @transform_0(%arg0: i32) -> (i32, i32) {
    %c0_i32 = arith.constant 0 : i32
    %c0_i32_0 = arith.constant 0 : i32
    return %arg0, %c0_i32 : i32, i32
  }
  func.func @transform_1(%arg0: i32) -> (i32, i32) {
    %c0_i32 = arith.constant 0 : i32
    %c0_i32_0 = arith.constant 0 : i32
    %c0_i32_1 = arith.constant 0 : i32
    return %c0_i32, %c0_i32_0 : i32, i32
  }
  func.func @transform_2(%arg0: i32) -> (i32, i32) {
    %c0_i32 = arith.constant 0 : i32
    %c0_i32_0 = arith.constant 0 : i32
    %c0_i32_1 = arith.constant 0 : i32
    return %c0_i32, %c0_i32_0 : i32, i32
  }
  func.func @transform_3(%arg0: i32) -> (i32, i32) {
    %c0_i32 = arith.constant 0 : i32
    %c0_i32_0 = arith.constant 0 : i32
    %c0_i32_1 = arith.constant 0 : i32
    return %c0_i32, %c0_i32_0 : i32, i32
  }
  func.func @transform_4(%arg0: i32) -> (i32, i32) {
    %c0_i32 = arith.constant 0 : i32
    %c0_i32_0 = arith.constant 0 : i32
    %c0_i32_1 = arith.constant 0 : i32
    return %c0_i32, %c0_i32_0 : i32, i32
  }
  func.func @transform_5(%arg0: i32) -> (i32, i32) {
    %c0_i32 = arith.constant 0 : i32
    %c0_i32_0 = arith.constant 0 : i32
    %c0_i32_1 = arith.constant 0 : i32
    return %c0_i32, %c0_i32_0 : i32, i32
  }
  func.func @transform_6(%arg0: i32) -> i32 {
    %c0_i32 = arith.constant 0 : i32
    %c0_i32_0 = arith.constant 0 : i32
    return %c0_i32 : i32
  }
  func.func @transform_7(%arg0: i32) -> (i32, i32, i32) {
    %c0_i32 = arith.constant 0 : i32
    %c0_i32_0 = arith.constant 0 : i32
    %c0_i32_1 = arith.constant 0 : i32
    return %arg0, %c0_i32, %c0_i32_0 : i32, i32, i32
  }
}

module attributes {stable_mosaic.version = 11 : i64} {
  func.func @expr_decoder_kernel(%arg0: i32, %arg1: memref<16x128xbf16, #tpu.memory_space<vmem>>, %arg2: memref<128x128xbf16, #tpu.memory_space<vmem>>, %arg3: memref<1x128xf32, #tpu.memory_space<vmem>>, %arg4: memref<128x128xbf16, #tpu.memory_space<vmem>>, %arg5: memref<1x128xf32, #tpu.memory_space<vmem>>, %arg6: memref<1x128xf32, #tpu.memory_space<vmem>>, %arg7: memref<1xf32, #tpu.memory_space<smem>>, %arg8: memref<1x1x16xf32, #tpu.memory_space<vmem>>) attributes {dimension_semantics = [#tpu.dimension_semantics<parallel>], iteration_bounds = array<i64: 1>, scalar_prefetch = 0 : i64, scratch_operands = 0 : i64, tpu.core_type = #tpu.core_type<tc>, window_params = [{transform_indices = @transform_0, window_bounds = array<i64: 16, 128>}, {pipeline_mode = #tpu.pipeline_mode<synchronous>, transform_indices = @transform_1, window_bounds = array<i64: 128, 128>}, {pipeline_mode = #tpu.pipeline_mode<synchronous>, transform_indices = @transform_2, window_bounds = array<i64: 1, 128>}, {pipeline_mode = #tpu.pipeline_mode<synchronous>, transform_indices = @transform_3, window_bounds = array<i64: 128, 128>}, {pipeline_mode = #tpu.pipeline_mode<synchronous>, transform_indices = @transform_4, window_bounds = array<i64: 1, 128>}, {pipeline_mode = #tpu.pipeline_mode<synchronous>, transform_indices = @transform_5, window_bounds = array<i64: 1, 128>}, {transform_indices = @transform_6, window_bounds = array<i64: 1>}, {transform_indices = @transform_7, window_bounds = array<i64: 1, 1, 16>}]} {
    %c0 = arith.constant 0 : index
    %c0_0 = arith.constant 0 : index
    %0 = vector.load %arg1[%c0, %c0_0] : memref<16x128xbf16, #tpu.memory_space<vmem>>, vector<16x128xbf16>
    %c0_1 = arith.constant 0 : index
    %c0_2 = arith.constant 0 : index
    %1 = vector.load %arg2[%c0_1, %c0_2] : memref<128x128xbf16, #tpu.memory_space<vmem>>, vector<128x128xbf16>
    %cst = arith.constant dense<0.000000e+00> : vector<16x128xf32>
    %2 = tpu.matmul %0, %1, %cst {dimension_numbers = #tpu.dot_dimension_numbers<[1], [0], [0], [1], [0, 0, 1, 1], [], []>} : vector<16x128xbf16>, vector<128x128xbf16>, vector<16x128xf32> -> vector<16x128xf32>
    %c0_3 = arith.constant 0 : index
    %c0_4 = arith.constant 0 : index
    %3 = vector.load %arg3[%c0_3, %c0_4] : memref<1x128xf32, #tpu.memory_space<vmem>>, vector<1x128xf32>
    %4 = vector.broadcast %3 : vector<1x128xf32> to vector<16x128xf32>
    %5 = arith.addf %2, %4 : vector<16x128xf32>
    %cst_5 = arith.constant 0.00999999977 : f32
    %6 = vector.broadcast %cst_5 : f32 to vector<16x128xf32>
    %7 = arith.mulf %6, %5 : vector<16x128xf32>
    %8 = arith.maximumf %5, %7 : vector<16x128xf32>
    %9 = arith.truncf %8 : vector<16x128xf32> to vector<16x128xbf16>
    %c0_6 = arith.constant 0 : index
    %c0_7 = arith.constant 0 : index
    %10 = vector.load %arg4[%c0_6, %c0_7] : memref<128x128xbf16, #tpu.memory_space<vmem>>, vector<128x128xbf16>
    %cst_8 = arith.constant dense<0.000000e+00> : vector<16x128xf32>
    %11 = tpu.matmul %9, %10, %cst_8 {dimension_numbers = #tpu.dot_dimension_numbers<[1], [0], [0], [1], [0, 0, 1, 1], [], []>} : vector<16x128xbf16>, vector<128x128xbf16>, vector<16x128xf32> -> vector<16x128xf32>
    %c0_9 = arith.constant 0 : index
    %c0_10 = arith.constant 0 : index
    %12 = vector.load %arg5[%c0_9, %c0_10] : memref<1x128xf32, #tpu.memory_space<vmem>>, vector<1x128xf32>
    %13 = vector.broadcast %12 : vector<1x128xf32> to vector<16x128xf32>
    %14 = arith.addf %11, %13 : vector<16x128xf32>
    %cst_11 = arith.constant 0.00999999977 : f32
    %15 = vector.broadcast %cst_11 : f32 to vector<16x128xf32>
    %16 = arith.mulf %15, %14 : vector<16x128xf32>
    %17 = arith.maximumf %14, %16 : vector<16x128xf32>
    %c0_12 = arith.constant 0 : index
    %c0_13 = arith.constant 0 : index
    %18 = vector.load %arg6[%c0_12, %c0_13] : memref<1x128xf32, #tpu.memory_space<vmem>>, vector<1x128xf32>
    %19 = vector.broadcast %18 : vector<1x128xf32> to vector<16x128xf32>
    %20 = arith.mulf %17, %19 : vector<16x128xf32>
    %cst_14 = arith.constant dense<0.000000e+00> : vector<16xf32>
    %21 = vector.multi_reduction <add>, %20, %cst_14 [1] : vector<16x128xf32> to vector<16xf32>
    %c0_15 = arith.constant 0 : index
    %22 = memref.load %arg7[%c0_15] : memref<1xf32, #tpu.memory_space<smem>>
    %23 = vector.broadcast %22 : f32 to vector<16xf32>
    %24 = arith.addf %21, %23 : vector<16xf32>
    %25 = vector.shape_cast %24 : vector<16xf32> to vector<1x1x16xf32>
    %c0_16 = arith.constant 0 : index
    %c0_17 = arith.constant 0 : index
    %c0_18 = arith.constant 0 : index
    %26 = vector.load %arg8[%c0_16, %c0_17, %c0_18] : memref<1x1x16xf32, #tpu.memory_space<vmem>>, vector<1x1x16xf32>
    tpu.vector_store %arg8[%c0_16, %c0_17, %c0_18], %25 {strides = array<i32>} : memref<1x1x16xf32, #tpu.memory_space<vmem>>, vector<1x1x16xf32>,
    return
  }
  func.func @transform_0(%arg0: i32) -> (i32, i32) {
    %c0_i32 = arith.constant 0 : i32
    %c0_i32_0 = arith.constant 0 : i32
    return %arg0, %c0_i32 : i32, i32
  }
  func.func @transform_1(%arg0: i32) -> (i32, i32) {
    %c0_i32 = arith.constant 0 : i32
    %c0_i32_0 = arith.constant 0 : i32
    %c0_i32_1 = arith.constant 0 : i32
    return %c0_i32, %c0_i32_0 : i32, i32
  }
  func.func @transform_2(%arg0: i32) -> (i32, i32) {
    %c0_i32 = arith.constant 0 : i32
    %c0_i32_0 = arith.constant 0 : i32
    %c0_i32_1 = arith.constant 0 : i32
    return %c0_i32, %c0_i32_0 : i32, i32
  }
  func.func @transform_3(%arg0: i32) -> (i32, i32) {
    %c0_i32 = arith.constant 0 : i32
    %c0_i32_0 = arith.constant 0 : i32
    %c0_i32_1 = arith.constant 0 : i32
    return %c0_i32, %c0_i32_0 : i32, i32
  }
  func.func @transform_4(%arg0: i32) -> (i32, i32) {
    %c0_i32 = arith.constant 0 : i32
    %c0_i32_0 = arith.constant 0 : i32
    %c0_i32_1 = arith.constant 0 : i32
    return %c0_i32, %c0_i32_0 : i32, i32
  }
  func.func @transform_5(%arg0: i32) -> (i32, i32) {
    %c0_i32 = arith.constant 0 : i32
    %c0_i32_0 = arith.constant 0 : i32
    %c0_i32_1 = arith.constant 0 : i32
    return %c0_i32, %c0_i32_0 : i32, i32
  }
  func.func @transform_6(%arg0: i32) -> i32 {
    %c0_i32 = arith.constant 0 : i32
    %c0_i32_0 = arith.constant 0 : i32
    return %c0_i32 : i32
  }
  func.func @transform_7(%arg0: i32) -> (i32, i32, i32) {
    %c0_i32 = arith.constant 0 : i32
    %c0_i32_0 = arith.constant 0 : i32
    %c0_i32_1 = arith.constant 0 : i32
    return %arg0, %c0_i32, %c0_i32_0 : i32, i32, i32
  }
}

</mosaic_0001>

<llo_original>
// kernel: tpu_custom_call.1
$region0: #{tpu_custom_call.1}
  #allocation0 [shape = 'u32[]', space=smem, size = 0x4, offset = 0x4, fixed_abs, tag = 'smem constant byte address 0x4 - core index']
  #allocation1 [shape = 'u32[144,128]{1,0:T(1,128)}', space=vmem, size = 0x12000, scoped, tag = 'internal scratch']
  #allocation2 [shape = 'f32[1]{0:T(128)S(6)}', space=smem, size = 0x200, scoped, tag = 'scoped memory for tpu_custom_call.1']
  %s0 = inlined_call_operand.hbm [shape: bf16[16,128], index: 0, kind: input, shape index: {}]
  %s1 = inlined_call_operand.hbm [shape: bf16[128,128], index: 1, kind: input, shape index: {}]
  %s2 = inlined_call_operand.vmem [shape: f32[1,128], index: 2, kind: input, shape index: {}]
  %s3 = inlined_call_operand.hbm [shape: bf16[128,128], index: 3, kind: input, shape index: {}]
  %s4 = inlined_call_operand.vmem [shape: f32[1,128], index: 4, kind: input, shape index: {}]
  %s5 = inlined_call_operand.vmem [shape: f32[1,128], index: 5, kind: input, shape index: {}]
  %s6 = inlined_call_operand.<no memory space> [shape: f32[1], index: 6, kind: input, shape index: {}]
  %s7 = inlined_call_operand.hbm [shape: f32[1,1,16], index: 7, kind: output, shape index: {}]
  %s8 = sld [smem:[#allocation0]]
  $region50: #{tpu_custom_call.1} parent=0
    _
  %s10 = ssub.s32 1, %s8
  %s11 = scalar_select 0, %s10, %s8
  %12 = sst [smem:[#allocation2]] %s6
  $region1: #{tpu_custom_call.1} parent=0
    #allocation3 [shape = 'u8[4096]{0}', space=vmem, size = 0x1000, scoped, tag = 'input window, operand 0, single buffered']
    #allocation4 [shape = 's32[1]{0}', space=sflag, size = 0x4, scoped, tag = 'scoped memory for tpu_custom_call.1']
    #allocation5 [shape = 's32[1]{0}', space=sflag, size = 0x4, scoped, tag = 'scoped memory for tpu_custom_call.1']
    #allocation6 [shape = 'u8[32768]{0}', space=vmem, size = 0x8000, scoped, tag = 'input window, operand 1, single buffered']
    #allocation7 [shape = 's32[1]{0}', space=sflag, size = 0x4, scoped, tag = 'scoped memory for tpu_custom_call.1']
    #allocation8 [shape = 'u8[32768]{0}', space=vmem, size = 0x8000, scoped, tag = 'input window, operand 3, single buffered']
    #allocation9 [shape = 'u8[512]{0}', space=vmem, size = 0x400, scoped, tag = 'output window, operand 0, single buffered']
    %13 = vsyncpa [#allocation4], 0
    %14 = vsyncpa [#allocation7], 0
    %15 = vsyncpa [#allocation5], 0
    // Predicated region
    $region2: #{tpu_custom_call.1} parent=1 // pred_check
      _
    $region3: #{tpu_custom_call.1} parent=1 // pred_check_branch
      %17 = sbr.rel (0) target = $region5
    $region4: #{tpu_custom_call.1} parent=1 // pred_region
      %s19 = ssub.s32 128, 128
      %20 = vsyncadd [#allocation4], %s19
      %s21 = sshll.u32 [#allocation3], 4
      %s22 = int_to_ptr.vmem [resolvable:$true] %s21
      %27 = dma.hbm_to_vmem [thread:$0]  %s0, 128, %s22, [#allocation4], 64, 64, 4
    $region5: #{tpu_custom_call.1} parent=1 // pred_fallthru
      _
    // Predicated region
    $region6: #{tpu_custom_call.1} parent=1 // pred_check
      _
    $region7: #{tpu_custom_call.1} parent=1 // pred_check_branch
      %29 = sbr.rel (0) target = $region9
    $region8: #{tpu_custom_call.1} parent=1 // pred_region
      %s31 = ssub.s32 1024, 1024
      %32 = vsyncadd [#allocation7], %s31
      %s33 = sshll.u32 [#allocation6], 4
      %s34 = int_to_ptr.vmem [resolvable:$true] %s33
      %39 = dma.hbm_to_vmem [thread:$0]  %s1, 1024, %s34, [#allocation7], 64, 64, 4
    $region9: #{tpu_custom_call.1} parent=1 // pred_fallthru
      _
    // Predicated region
    $region10: #{tpu_custom_call.1} parent=1 // pred_check
      _
    $region11: #{tpu_custom_call.1} parent=1 // pred_check_branch
      %41 = sbr.rel (0) target = $region13
    $region12: #{tpu_custom_call.1} parent=1 // pred_region
      _
    $region13: #{tpu_custom_call.1} parent=1 // pred_fallthru
      _
    // Predicated region
    $region14: #{tpu_custom_call.1} parent=1 // pred_check
      _
    $region15: #{tpu_custom_call.1} parent=1 // pred_check_branch
      %43 = sbr.rel (0) target = $region17
    $region16: #{tpu_custom_call.1} parent=1 // pred_region
      %s45 = ssub.s32 1024, 1024
      %46 = vsyncadd [#allocation7], %s45
      %s47 = sshll.u32 [#allocation8], 4
      %s48 = int_to_ptr.vmem [resolvable:$true] %s47
      %53 = dma.hbm_to_vmem [thread:$0]  %s3, 1024, %s48, [#allocation7], 64, 64, 4
    $region17: #{tpu_custom_call.1} parent=1 // pred_fallthru
      _
    // Predicated region
    $region18: #{tpu_custom_call.1} parent=1 // pred_check
      _
    $region19: #{tpu_custom_call.1} parent=1 // pred_check_branch
      %55 = sbr.rel (0) target = $region21
    $region20: #{tpu_custom_call.1} parent=1 // pred_region
      _
    $region21: #{tpu_custom_call.1} parent=1 // pred_fallthru
      _
    // Predicated region
    $region22: #{tpu_custom_call.1} parent=1 // pred_check
      _
    $region23: #{tpu_custom_call.1} parent=1 // pred_check_branch
      %57 = sbr.rel (0) target = $region25
    $region24: #{tpu_custom_call.1} parent=1 // pred_region
      _
    $region25: #{tpu_custom_call.1} parent=1 // pred_fallthru
      _
    // Predicated region
    $region26: #{tpu_custom_call.1} parent=1 // pred_check
      _
    $region27: #{tpu_custom_call.1} parent=1 // pred_check_branch
      %59 = sbr.rel (0) target = $region29
    $region28: #{tpu_custom_call.1} parent=1 // pred_region
      _
    $region29: #{tpu_custom_call.1} parent=1 // pred_fallthru
      _
    // Predicated region
    $region30: #{tpu_custom_call.1} parent=1 // pred_check
      _
    $region31: #{tpu_custom_call.1} parent=1 // pred_check_branch
      %61 = sbr.rel (0) target = $region33
    $region32: #{tpu_custom_call.1} parent=1 // pred_region
      %62 = dma.done [#allocation4], 128
    $region33: #{tpu_custom_call.1} parent=1 // pred_fallthru
      _
    // Predicated region
    $region34: #{tpu_custom_call.1} parent=1 // pred_check
      _
    $region35: #{tpu_custom_call.1} parent=1 // pred_check_branch
      %64 = sbr.rel (0) target = $region37
    $region36: #{tpu_custom_call.1} parent=1 // pred_region
      %65 = dma.done [#allocation7], 1024
    $region37: #{tpu_custom_call.1} parent=1 // pred_fallthru
      _
    // Predicated region
    $region38: #{tpu_custom_call.1} parent=1 // pred_check
      _
    $region39: #{tpu_custom_call.1} parent=1 // pred_check_branch
      %67 = sbr.rel (0) target = $region41
    $region40: #{tpu_custom_call.1} parent=1 // pred_region
      %68 = dma.done [#allocation7], 1024
    $region41: #{tpu_custom_call.1} parent=1 // pred_fallthru
      _
    %v70 = vld [vmem:[#allocation3] sm:$0xf]
    %v71 = vld [vmem:[#allocation3 + $0x4] sm:$0xf]
    %v72 = vld [vmem:[#allocation6] sm:$0xf]
    %v73 = vld [vmem:[#allocation6 + $0x4] sm:$0xf]
    %v74 = vld [vmem:[#allocation6 + $0x8] sm:$0xf]
    %v75 = vld [vmem:[#allocation6 + $0xc] sm:$0xf]
    %v76 = vld [vmem:[#allocation6 + $0x10] sm:$0xf]
    %v77 = vld [vmem:[#allocation6 + $0x14] sm:$0xf]
    %v78 = vld [vmem:[#allocation6 + $0x18] sm:$0xf]
    %v79 = vld [vmem:[#allocation6 + $0x1c] sm:$0xf]
    %v80 = vld [vmem:[#allocation6 + $0x20] sm:$0xf]
    %v81 = vld [vmem:[#allocation6 + $0x24] sm:$0xf]
    %v82 = vld [vmem:[#allocation6 + $0x28] sm:$0xf]
    %v83 = vld [vmem:[#allocation6 + $0x2c] sm:$0xf]
    %v84 = vld [vmem:[#allocation6 + $0x30] sm:$0xf]
    %v85 = vld [vmem:[#allocation6 + $0x34] sm:$0xf]
    %v86 = vld [vmem:[#allocation6 + $0x38] sm:$0xf]
    %v87 = vld [vmem:[#allocation6 + $0x3c] sm:$0xf]
    %v88 = vld [vmem:[%s2] sm:$0x1]
    %v90 = vlaneseq
    %v91 = vshrl.u32 %v90, 7
    %v92 = vsub.s32 0, %v91
    %v93 = vrot.slane %v88, %v92
    %v97 = vunpack.c.l.b16 %v70
    %v98 = vunpack.c.l.b16 %v71
    %v99 = vpack.c.b16 %v98, %v97
    %v117 = vunpack.c.l.b16 %v72
    %v118 = vunpack.c.l.b16 %v73
    %v119 = vunpack.c.l.b16 %v74
    %v120 = vunpack.c.l.b16 %v75
    %v121 = vunpack.c.l.b16 %v76
    %v122 = vunpack.c.l.b16 %v77
    %v123 = vunpack.c.l.b16 %v78
    %v124 = vunpack.c.l.b16 %v79
    %v125 = vunpack.c.l.b16 %v80
    %v126 = vunpack.c.l.b16 %v81
    %v127 = vunpack.c.l.b16 %v82
    %v128 = vunpack.c.l.b16 %v83
    %v129 = vunpack.c.l.b16 %v84
    %v130 = vunpack.c.l.b16 %v85
    %v131 = vunpack.c.l.b16 %v86
    %v132 = vunpack.c.l.b16 %v87
    %v133 = vpack.c.b16 %v118, %v117
    %v134 = vpack.c.b16 %v120, %v119
    %v135 = vpack.c.b16 %v122, %v121
    %v136 = vpack.c.b16 %v124, %v123
    %v137 = vpack.c.b16 %v126, %v125
    %v138 = vpack.c.b16 %v128, %v127
    %v139 = vpack.c.b16 %v130, %v129
    %v140 = vpack.c.b16 %v132, %v131
    %149 = vmatprep.subr.bf16.mxu0 0
    %150 = vmatpush1.bf16.msra.mxu0 %v133
    %151 = vmatprep.subr.bf16.mxu0 0
    %152 = vmatpush1.bf16.msra.mxu0 %v134
    %153 = vmatprep.subr.bf16.mxu0 0
    %154 = vmatpush1.bf16.msra.mxu0 %v135
    %155 = vmatprep.subr.bf16.mxu0 0
    %156 = vmatpush1.bf16.msra.mxu0 %v136
    %157 = vmatprep.subr.bf16.mxu0 0
    %158 = vmatpush1.bf16.msra.mxu0 %v137
    %159 = vmatprep.subr.bf16.mxu0 0
    %160 = vmatpush1.bf16.msra.mxu0 %v138
    %161 = vmatprep.subr.bf16.mxu0 0
    %162 = vmatpush1.bf16.msra.mxu0 %v139
    %163 = vmatprep.subr.bf16.mxu0 0
    %164 = vmatpush1.bf16.msra.mxu0 %v140
    %165 = vmatprep.subr.bf16.mxu0 0
    %166 = vmatpush1.bf16.msra.mxu0 0
    %167 = vmatprep.subr.bf16.mxu0 0
    %168 = vmatpush1.bf16.msra.mxu0 0
    %169 = vmatprep.subr.bf16.mxu0 0
    %170 = vmatpush1.bf16.msra.mxu0 0
    %171 = vmatprep.subr.bf16.mxu0 0
    %172 = vmatpush1.bf16.msra.mxu0 0
    %173 = vmatprep.subr.bf16.mxu0 0
    %174 = vmatpush1.bf16.msra.mxu0 0
    %175 = vmatprep.subr.bf16.mxu0 0
    %176 = vmatpush1.bf16.msra.mxu0 0
    %177 = vmatprep.subr.bf16.mxu0 0
    %178 = vmatpush1.bf16.msra.mxu0 0
    %179 = vmatprep.subr.bf16.mxu0 0
    %180 = vmatpush1.bf16.msra.mxu0 0
    %181 = vmatprep.mubr.bf16.mxu0 0
    %182 = vmatmul.mubr.bf16.gmra.mrb[0].mxu0 %v99
    %v183 = vpop.f32.mrb[0].mxu0
    %v184 = vadd.f32 %v93, %v183
    %v185 = vpop.f32.mrb[0].mxu0
    %v186 = vpop.f32.mrb[0].mxu0
    %v187 = vadd.f32 %v93, %v186
    %v188 = vpop.f32.mrb[0].mxu0
    %189 = vdwg.mxu0
    %v190 = vmul.f32 %v184, 0.01
    %v191 = vmul.f32 %v187, 0.01
    %v192 = vmax.f32 %v184, %v190
    %v193 = vmax.f32 %v187, %v191
    %v194 = vpack.c.bf16 %v193, %v192
    %v195 = vld [vmem:[#allocation8] sm:$0xf]
    %v196 = vld [vmem:[#allocation8 + $0x4] sm:$0xf]
    %v197 = vld [vmem:[#allocation8 + $0x8] sm:$0xf]
    %v198 = vld [vmem:[#allocation8 + $0xc] sm:$0xf]
    %v199 = vld [vmem:[#allocation8 + $0x10] sm:$0xf]
    %v200 = vld [vmem:[#allocation8 + $0x14] sm:$0xf]
    %v201 = vld [vmem:[#allocation8 + $0x18] sm:$0xf]
    %v202 = vld [vmem:[#allocation8 + $0x1c] sm:$0xf]
    %v203 = vld [vmem:[#allocation8 + $0x20] sm:$0xf]
    %v204 = vld [vmem:[#allocation8 + $0x24] sm:$0xf]
    %v205 = vld [vmem:[#allocation8 + $0x28] sm:$0xf]
    %v206 = vld [vmem:[#allocation8 + $0x2c] sm:$0xf]
    %v207 = vld [vmem:[#allocation8 + $0x30] sm:$0xf]
    %v208 = vld [vmem:[#allocation8 + $0x34] sm:$0xf]
    %v209 = vld [vmem:[#allocation8 + $0x38] sm:$0xf]
    %v210 = vld [vmem:[#allocation8 + $0x3c] sm:$0xf]
    %v211 = vld [vmem:[%s4] sm:$0x1]
    %v213 = vlaneseq
    %v214 = vshrl.u32 %v213, 7
    %v215 = vsub.s32 0, %v214
    %v216 = vrot.slane %v211, %v215
    %v234 = vunpack.c.l.b16 %v195
    %v235 = vunpack.c.l.b16 %v196
    %v236 = vunpack.c.l.b16 %v197
    %v237 = vunpack.c.l.b16 %v198
    %v238 = vunpack.c.l.b16 %v199
    %v239 = vunpack.c.l.b16 %v200
    %v240 = vunpack.c.l.b16 %v201
    %v241 = vunpack.c.l.b16 %v202
    %v242 = vunpack.c.l.b16 %v203
    %v243 = vunpack.c.l.b16 %v204
    %v244 = vunpack.c.l.b16 %v205
    %v245 = vunpack.c.l.b16 %v206
    %v246 = vunpack.c.l.b16 %v207
    %v247 = vunpack.c.l.b16 %v208
    %v248 = vunpack.c.l.b16 %v209
    %v249 = vunpack.c.l.b16 %v210
    %v250 = vpack.c.b16 %v235, %v234
    %v251 = vpack.c.b16 %v237, %v236
    %v252 = vpack.c.b16 %v239, %v238
    %v253 = vpack.c.b16 %v241, %v240
    %v254 = vpack.c.b16 %v243, %v242
    %v255 = vpack.c.b16 %v245, %v244
    %v256 = vpack.c.b16 %v247, %v246
    %v257 = vpack.c.b16 %v249, %v248
    %266 = vmatprep.subr.bf16.mxu0 0
    %267 = vmatpush1.bf16.msra.mxu0 %v250
    %268 = vmatprep.subr.bf16.mxu0 0
    %269 = vmatpush1.bf16.msra.mxu0 %v251
    %270 = vmatprep.subr.bf16.mxu0 0
    %271 = vmatpush1.bf16.msra.mxu0 %v252
    %272 = vmatprep.subr.bf16.mxu0 0
    %273 = vmatpush1.bf16.msra.mxu0 %v253
    %274 = vmatprep.subr.bf16.mxu0 0
    %275 = vmatpush1.bf16.msra.mxu0 %v254
    %276 = vmatprep.subr.bf16.mxu0 0
    %277 = vmatpush1.bf16.msra.mxu0 %v255
    %278 = vmatprep.subr.bf16.mxu0 0
    %279 = vmatpush1.bf16.msra.mxu0 %v256
    %280 = vmatprep.subr.bf16.mxu0 0
    %281 = vmatpush1.bf16.msra.mxu0 %v257
    %282 = vmatprep.subr.bf16.mxu0 0
    %283 = vmatpush1.bf16.msra.mxu0 0
    %284 = vmatprep.subr.bf16.mxu0 0
    %285 = vmatpush1.bf16.msra.mxu0 0
    %286 = vmatprep.subr.bf16.mxu0 0
    %287 = vmatpush1.bf16.msra.mxu0 0
    %288 = vmatprep.subr.bf16.mxu0 0
    %289 = vmatpush1.bf16.msra.mxu0 0
    %290 = vmatprep.subr.bf16.mxu0 0
    %291 = vmatpush1.bf16.msra.mxu0 0
    %292 = vmatprep.subr.bf16.mxu0 0
    %293 = vmatpush1.bf16.msra.mxu0 0
    %294 = vmatprep.subr.bf16.mxu0 0
    %295 = vmatpush1.bf16.msra.mxu0 0
    %296 = vmatprep.subr.bf16.mxu0 0
    %297 = vmatpush1.bf16.msra.mxu0 0
    %298 = vmatprep.mubr.bf16.mxu0 0
    %299 = vmatmul.mubr.bf16.gmra.mrb[0].mxu0 %v194
    %v300 = vpop.f32.mrb[0].mxu0
    %v301 = vadd.f32 %v216, %v300
    %v302 = vpop.f32.mrb[0].mxu0
    %v303 = vpop.f32.mrb[0].mxu0
    %v304 = vadd.f32 %v216, %v303
    %v305 = vpop.f32.mrb[0].mxu0
    %306 = vdwg.mxu0
    %v307 = vmul.f32 %v301, 0.01
    %v308 = vmul.f32 %v304, 0.01
    %v309 = vmax.f32 %v301, %v307
    %v310 = vmax.f32 %v304, %v308
    %v311 = vld [vmem:[%s5] sm:$0x1]
    %v313 = vlaneseq
    %v314 = vshrl.u32 %v313, 7
    %v315 = vsub.s32 0, %v314
    %v316 = vrot.slane %v311, %v315
    %v318 = vmul.f32 %v309, %v316
    %v319 = vmul.f32 %v310, %v316
    %320 = vadd.xlane.f32.xlu0 %v318
    %v321 = vpop.xlane.xlu0 %320
    %322 = vadd.xlane.f32.xlu0 %v319
    %v323 = vpop.xlane.xlu0 %322
    %s324 = sld [smem:[#allocation2]]
    %v325 = vstv %s324
    %v326 = vadd.f32 %v321, %v325
    %v327 = vadd.f32 %v323, %v325
    %v330 = vlaneseq
    %v331 = vand.u32 %v330, 127
    %v332 = vlaneseq
    %v333 = vshrl.u32 %v332, 7
    %v334 = vsub.s32 %v331, %v333
    %v335 = vrot.slane %v326, %v334
    %v336 = vadd.s32 %v331, 4294967288
    %v337 = vlaneseq
    %v338 = vshrl.u32 %v337, 7
    %v339 = vsub.s32 %v336, %v338
    %v340 = vrot.slane %v327, %v339
    %vm341 = vcmask 130112
    %v342 = vsel %vm341, %v340, %v335
    %vm344 = vcmask 122880
    %345 = vst.msk [vmem:[#allocation9] sm:$0x1] %vm344, %v342
    // Predicated region
    $region42: #{tpu_custom_call.1} parent=1 // pred_check
      _
    $region43: #{tpu_custom_call.1} parent=1 // pred_check_branch
      %347 = sbr.rel (0) target = $region45
    $region44: #{tpu_custom_call.1} parent=1 // pred_region
      %s349 = ssub.s32 16, 16
      %350 = vsyncadd [#allocation5], %s349
      %s352 = sshll.u32 [#allocation9], 4
      %s353 = int_to_ptr.vmem [resolvable:$true] %s352
      %355 = dma.vmem_to_hbm [thread:$0]  %s353, 16, %s7, [#allocation5]
    $region45: #{tpu_custom_call.1} parent=1 // pred_fallthru
      _
    // Predicated region
    $region46: #{tpu_custom_call.1} parent=1 // pred_check
      _
    $region47: #{tpu_custom_call.1} parent=1 // pred_check_branch
      %357 = sbr.rel (0) target = $region49
    $region48: #{tpu_custom_call.1} parent=1 // pred_region
      %358 = dma.done [#allocation5], 16
    $region49: #{tpu_custom_call.1} parent=1 // pred_fallthru
      _
    %359 = vsyncpa [#allocation4], 1
    %360 = vsyncpa [#allocation7], 1
    %361 = vsyncpa [#allocation5], 1

// kernel: tpu_custom_call.1
$region0: #{tpu_custom_call.1}
  #allocation0 [shape = 'u32[]', space=smem, size = 0x4, offset = 0x4, fixed_abs, tag = 'smem constant byte address 0x4 - core index']
  #allocation1 [shape = 'u32[144,128]{1,0:T(1,128)}', space=vmem, size = 0x12000, scoped, tag = 'internal scratch']
  #allocation2 [shape = 'f32[1]{0:T(128)S(6)}', space=smem, size = 0x200, scoped, tag = 'scoped memory for tpu_custom_call.1']
  %s0 = inlined_call_operand.hbm [shape: bf16[16,128], index: 0, kind: input, shape index: {}]
  %s1 = inlined_call_operand.hbm [shape: bf16[128,128], index: 1, kind: input, shape index: {}]
  %s2 = inlined_call_operand.vmem [shape: f32[1,128], index: 2, kind: input, shape index: {}]
  %s3 = inlined_call_operand.hbm [shape: bf16[128,128], index: 3, kind: input, shape index: {}]
  %s4 = inlined_call_operand.vmem [shape: f32[1,128], index: 4, kind: input, shape index: {}]
  %s5 = inlined_call_operand.vmem [shape: f32[1,128], index: 5, kind: input, shape index: {}]
  %s6 = inlined_call_operand.<no memory space> [shape: f32[1], index: 6, kind: input, shape index: {}]
  %s7 = inlined_call_operand.hbm [shape: f32[1,1,16], index: 7, kind: output, shape index: {}]
  %s8 = sld [smem:[#allocation0]]
  $region50: #{tpu_custom_call.1} parent=0
    _
  %s10 = ssub.s32 1, %s8
  %s11 = scalar_select 0, %s10, %s8
  %12 = sst [smem:[#allocation2]] %s6
  $region1: #{tpu_custom_call.1} parent=0
    #allocation3 [shape = 'u8[4096]{0}', space=vmem, size = 0x1000, scoped, tag = 'input window, operand 0, single buffered']
    #allocation4 [shape = 's32[1]{0}', space=sflag, size = 0x4, scoped, tag = 'scoped memory for tpu_custom_call.1']
    #allocation5 [shape = 's32[1]{0}', space=sflag, size = 0x4, scoped, tag = 'scoped memory for tpu_custom_call.1']
    #allocation6 [shape = 'u8[32768]{0}', space=vmem, size = 0x8000, scoped, tag = 'input window, operand 1, single buffered']
    #allocation7 [shape = 's32[1]{0}', space=sflag, size = 0x4, scoped, tag = 'scoped memory for tpu_custom_call.1']
    #allocation8 [shape = 'u8[32768]{0}', space=vmem, size = 0x8000, scoped, tag = 'input window, operand 3, single buffered']
    #allocation9 [shape = 'u8[512]{0}', space=vmem, size = 0x400, scoped, tag = 'output window, operand 0, single buffered']
    %13 = vsyncpa [#allocation4], 0
    %14 = vsyncpa [#allocation7], 0
    %15 = vsyncpa [#allocation5], 0
    // Predicated region
    $region2: #{tpu_custom_call.1} parent=1 // pred_check
      _
    $region3: #{tpu_custom_call.1} parent=1 // pred_check_branch
      %17 = sbr.rel (0) target = $region5
    $region4: #{tpu_custom_call.1} parent=1 // pred_region
      %s19 = ssub.s32 128, 128
      %20 = vsyncadd [#allocation4], %s19
      %s21 = sshll.u32 [#allocation3], 4
      %s22 = int_to_ptr.vmem [resolvable:$true] %s21
      %27 = dma.hbm_to_vmem [thread:$0]  %s0, 128, %s22, [#allocation4], 64, 64, 4
    $region5: #{tpu_custom_call.1} parent=1 // pred_fallthru
      _
    // Predicated region
    $region6: #{tpu_custom_call.1} parent=1 // pred_check
      _
    $region7: #{tpu_custom_call.1} parent=1 // pred_check_branch
      %29 = sbr.rel (0) target = $region9
    $region8: #{tpu_custom_call.1} parent=1 // pred_region
      %s31 = ssub.s32 1024, 1024
      %32 = vsyncadd [#allocation7], %s31
      %s33 = sshll.u32 [#allocation6], 4
      %s34 = int_to_ptr.vmem [resolvable:$true] %s33
      %39 = dma.hbm_to_vmem [thread:$0]  %s1, 1024, %s34, [#allocation7], 64, 64, 4
    $region9: #{tpu_custom_call.1} parent=1 // pred_fallthru
      _
    // Predicated region
    $region10: #{tpu_custom_call.1} parent=1 // pred_check
      _
    $region11: #{tpu_custom_call.1} parent=1 // pred_check_branch
      %41 = sbr.rel (0) target = $region13
    $region12: #{tpu_custom_call.1} parent=1 // pred_region
      _
    $region13: #{tpu_custom_call.1} parent=1 // pred_fallthru
      _
    // Predicated region
    $region14: #{tpu_custom_call.1} parent=1 // pred_check
      _
    $region15: #{tpu_custom_call.1} parent=1 // pred_check_branch
      %43 = sbr.rel (0) target = $region17
    $region16: #{tpu_custom_call.1} parent=1 // pred_region
      %s45 = ssub.s32 1024, 1024
      %46 = vsyncadd [#allocation7], %s45
      %s47 = sshll.u32 [#allocation8], 4
      %s48 = int_to_ptr.vmem [resolvable:$true] %s47
      %53 = dma.hbm_to_vmem [thread:$0]  %s3, 1024, %s48, [#allocation7], 64, 64, 4
    $region17: #{tpu_custom_call.1} parent=1 // pred_fallthru
      _
    // Predicated region
    $region18: #{tpu_custom_call.1} parent=1 // pred_check
      _
    $region19: #{tpu_custom_call.1} parent=1 // pred_check_branch
      %55 = sbr.rel (0) target = $region21
    $region20: #{tpu_custom_call.1} parent=1 // pred_region
      _
    $region21: #{tpu_custom_call.1} parent=1 // pred_fallthru
      _
    // Predicated region
    $region22: #{tpu_custom_call.1} parent=1 // pred_check
      _
    $region23: #{tpu_custom_call.1} parent=1 // pred_check_branch
      %57 = sbr.rel (0) target = $region25
    $region24: #{tpu_custom_call.1} parent=1 // pred_region
      _
    $region25: #{tpu_custom_call.1} parent=1 // pred_fallthru
      _
    // Predicated region
    $region26: #{tpu_custom_call.1} parent=1 // pred_check
      _
    $region27: #{tpu_custom_call.1} parent=1 // pred_check_branch
      %59 = sbr.rel (0) target = $region29
    $region28: #{tpu_custom_call.1} parent=1 // pred_region
      _
    $region29: #{tpu_custom_call.1} parent=1 // pred_fallthru
      _
    // Predicated region
    $region30: #{tpu_custom_call.1} parent=1 // pred_check
      _
    $region31: #{tpu_custom_call.1} parent=1 // pred_check_branch
      %61 = sbr.rel (0) target = $region33
    $region32: #{tpu_custom_call.1} parent=1 // pred_region
      %62 = dma.done [#allocation4], 128
    $region33: #{tpu_custom_call.1} parent=1 // pred_fallthru
      _
    // Predicated region
    $region34: #{tpu_custom_call.1} parent=1 // pred_check
      _
    $region35: #{tpu_custom_call.1} parent=1 // pred_check_branch
      %64 = sbr.rel (0) target = $region37
    $region36: #{tpu_custom_call.1} parent=1 // pred_region
      %65 = dma.done [#allocation7], 1024
    $region37: #{tpu_custom_call.1} parent=1 // pred_fallthru
      _
    // Predicated region
    $region38: #{tpu_custom_call.1} parent=1 // pred_check
      _
    $region39: #{tpu_custom_call.1} parent=1 // pred_check_branch
      %67 = sbr.rel (0) target = $region41
    $region40: #{tpu_custom_call.1} parent=1 // pred_region
      %68 = dma.done [#allocation7], 1024
    $region41: #{tpu_custom_call.1} parent=1 // pred_fallthru
      _
    %v70 = vld [vmem:[#allocation3] sm:$0xf]
    %v71 = vld [vmem:[#allocation3 + $0x4] sm:$0xf]
    %v72 = vld [vmem:[#allocation6] sm:$0xf]
    %v73 = vld [vmem:[#allocation6 + $0x4] sm:$0xf]
    %v74 = vld [vmem:[#allocation6 + $0x8] sm:$0xf]
    %v75 = vld [vmem:[#allocation6 + $0xc] sm:$0xf]
    %v76 = vld [vmem:[#allocation6 + $0x10] sm:$0xf]
    %v77 = vld [vmem:[#allocation6 + $0x14] sm:$0xf]
    %v78 = vld [vmem:[#allocation6 + $0x18] sm:$0xf]
    %v79 = vld [vmem:[#allocation6 + $0x1c] sm:$0xf]
    %v80 = vld [vmem:[#allocation6 + $0x20] sm:$0xf]
    %v81 = vld [vmem:[#allocation6 + $0x24] sm:$0xf]
    %v82 = vld [vmem:[#allocation6 + $0x28] sm:$0xf]
    %v83 = vld [vmem:[#allocation6 + $0x2c] sm:$0xf]
    %v84 = vld [vmem:[#allocation6 + $0x30] sm:$0xf]
    %v85 = vld [vmem:[#allocation6 + $0x34] sm:$0xf]
    %v86 = vld [vmem:[#allocation6 + $0x38] sm:$0xf]
    %v87 = vld [vmem:[#allocation6 + $0x3c] sm:$0xf]
    %v88 = vld [vmem:[%s2] sm:$0x1]
    %v90 = vlaneseq
    %v91 = vshrl.u32 %v90, 7
    %v92 = vsub.s32 0, %v91
    %v93 = vrot.slane %v88, %v92
    %v97 = vunpack.c.l.b16 %v70
    %v98 = vunpack.c.l.b16 %v71
    %v99 = vpack.c.b16 %v98, %v97
    %v117 = vunpack.c.l.b16 %v72
    %v118 = vunpack.c.l.b16 %v73
    %v119 = vunpack.c.l.b16 %v74
    %v120 = vunpack.c.l.b16 %v75
    %v121 = vunpack.c.l.b16 %v76
    %v122 = vunpack.c.l.b16 %v77
    %v123 = vunpack.c.l.b16 %v78
    %v124 = vunpack.c.l.b16 %v79
    %v125 = vunpack.c.l.b16 %v80
    %v126 = vunpack.c.l.b16 %v81
    %v127 = vunpack.c.l.b16 %v82
    %v128 = vunpack.c.l.b16 %v83
    %v129 = vunpack.c.l.b16 %v84
    %v130 = vunpack.c.l.b16 %v85
    %v131 = vunpack.c.l.b16 %v86
    %v132 = vunpack.c.l.b16 %v87
    %v133 = vpack.c.b16 %v118, %v117
    %v134 = vpack.c.b16 %v120, %v119
    %v135 = vpack.c.b16 %v122, %v121
    %v136 = vpack.c.b16 %v124, %v123
    %v137 = vpack.c.b16 %v126, %v125
    %v138 = vpack.c.b16 %v128, %v127
    %v139 = vpack.c.b16 %v130, %v129
    %v140 = vpack.c.b16 %v132, %v131
    %149 = vmatprep.subr.bf16.mxu0 0
    %150 = vmatpush1.bf16.msra.mxu0 %v133
    %151 = vmatprep.subr.bf16.mxu0 0
    %152 = vmatpush1.bf16.msra.mxu0 %v134
    %153 = vmatprep.subr.bf16.mxu0 0
    %154 = vmatpush1.bf16.msra.mxu0 %v135
    %155 = vmatprep.subr.bf16.mxu0 0
    %156 = vmatpush1.bf16.msra.mxu0 %v136
    %157 = vmatprep.subr.bf16.mxu0 0
    %158 = vmatpush1.bf16.msra.mxu0 %v137
    %159 = vmatprep.subr.bf16.mxu0 0
    %160 = vmatpush1.bf16.msra.mxu0 %v138
    %161 = vmatprep.subr.bf16.mxu0 0
    %162 = vmatpush1.bf16.msra.mxu0 %v139
    %163 = vmatprep.subr.bf16.mxu0 0
    %164 = vmatpush1.bf16.msra.mxu0 %v140
    %165 = vmatprep.subr.bf16.mxu0 0
    %166 = vmatpush1.bf16.msra.mxu0 0
    %167 = vmatprep.subr.bf16.mxu0 0
    %168 = vmatpush1.bf16.msra.mxu0 0
    %169 = vmatprep.subr.bf16.mxu0 0
    %170 = vmatpush1.bf16.msra.mxu0 0
    %171 = vmatprep.subr.bf16.mxu0 0
    %172 = vmatpush1.bf16.msra.mxu0 0
    %173 = vmatprep.subr.bf16.mxu0 0
    %174 = vmatpush1.bf16.msra.mxu0 0
    %175 = vmatprep.subr.bf16.mxu0 0
    %176 = vmatpush1.bf16.msra.mxu0 0
    %177 = vmatprep.subr.bf16.mxu0 0
    %178 = vmatpush1.bf16.msra.mxu0 0
    %179 = vmatprep.subr.bf16.mxu0 0
    %180 = vmatpush1.bf16.msra.mxu0 0
    %181 = vmatprep.mubr.bf16.mxu0 0
    %182 = vmatmul.mubr.bf16.gmra.mrb[0].mxu0 %v99
    %v183 = vpop.f32.mrb[0].mxu0
    %v184 = vadd.f32 %v93, %v183
    %v185 = vpop.f32.mrb[0].mxu0
    %v186 = vpop.f32.mrb[0].mxu0
    %v187 = vadd.f32 %v93, %v186
    %v188 = vpop.f32.mrb[0].mxu0
    %189 = vdwg.mxu0
    %v190 = vmul.f32 %v184, 0.01
    %v191 = vmul.f32 %v187, 0.01
    %v192 = vmax.f32 %v184, %v190
    %v193 = vmax.f32 %v187, %v191
    %v194 = vpack.c.bf16 %v193, %v192
    %v195 = vld [vmem:[#allocation8] sm:$0xf]
    %v196 = vld [vmem:[#allocation8 + $0x4] sm:$0xf]
    %v197 = vld [vmem:[#allocation8 + $0x8] sm:$0xf]
    %v198 = vld [vmem:[#allocation8 + $0xc] sm:$0xf]
    %v199 = vld [vmem:[#allocation8 + $0x10] sm:$0xf]
    %v200 = vld [vmem:[#allocation8 + $0x14] sm:$0xf]
    %v201 = vld [vmem:[#allocation8 + $0x18] sm:$0xf]
    %v202 = vld [vmem:[#allocation8 + $0x1c] sm:$0xf]
    %v203 = vld [vmem:[#allocation8 + $0x20] sm:$0xf]
    %v204 = vld [vmem:[#allocation8 + $0x24] sm:$0xf]
    %v205 = vld [vmem:[#allocation8 + $0x28] sm:$0xf]
    %v206 = vld [vmem:[#allocation8 + $0x2c] sm:$0xf]
    %v207 = vld [vmem:[#allocation8 + $0x30] sm:$0xf]
    %v208 = vld [vmem:[#allocation8 + $0x34] sm:$0xf]
    %v209 = vld [vmem:[#allocation8 + $0x38] sm:$0xf]
    %v210 = vld [vmem:[#allocation8 + $0x3c] sm:$0xf]
    %v211 = vld [vmem:[%s4] sm:$0x1]
    %v213 = vlaneseq
    %v214 = vshrl.u32 %v213, 7
    %v215 = vsub.s32 0, %v214
    %v216 = vrot.slane %v211, %v215
    %v234 = vunpack.c.l.b16 %v195
    %v235 = vunpack.c.l.b16 %v196
    %v236 = vunpack.c.l.b16 %v197
    %v237 = vunpack.c.l.b16 %v198
    %v238 = vunpack.c.l.b16 %v199
    %v239 = vunpack.c.l.b16 %v200
    %v240 = vunpack.c.l.b16 %v201
    %v241 = vunpack.c.l.b16 %v202
    %v242 = vunpack.c.l.b16 %v203
    %v243 = vunpack.c.l.b16 %v204
    %v244 = vunpack.c.l.b16 %v205
    %v245 = vunpack.c.l.b16 %v206
    %v246 = vunpack.c.l.b16 %v207
    %v247 = vunpack.c.l.b16 %v208
    %v248 = vunpack.c.l.b16 %v209
    %v249 = vunpack.c.l.b16 %v210
    %v250 = vpack.c.b16 %v235, %v234
    %v251 = vpack.c.b16 %v237, %v236
    %v252 = vpack.c.b16 %v239, %v238
    %v253 = vpack.c.b16 %v241, %v240
    %v254 = vpack.c.b16 %v243, %v242
    %v255 = vpack.c.b16 %v245, %v244
    %v256 = vpack.c.b16 %v247, %v246
    %v257 = vpack.c.b16 %v249, %v248
    %266 = vmatprep.subr.bf16.mxu0 0
    %267 = vmatpush1.bf16.msra.mxu0 %v250
    %268 = vmatprep.subr.bf16.mxu0 0
    %269 = vmatpush1.bf16.msra.mxu0 %v251
    %270 = vmatprep.subr.bf16.mxu0 0
    %271 = vmatpush1.bf16.msra.mxu0 %v252
    %272 = vmatprep.subr.bf16.mxu0 0
    %273 = vmatpush1.bf16.msra.mxu0 %v253
    %274 = vmatprep.subr.bf16.mxu0 0
    %275 = vmatpush1.bf16.msra.mxu0 %v254
    %276 = vmatprep.subr.bf16.mxu0 0
    %277 = vmatpush1.bf16.msra.mxu0 %v255
    %278 = vmatprep.subr.bf16.mxu0 0
    %279 = vmatpush1.bf16.msra.mxu0 %v256
    %280 = vmatprep.subr.bf16.mxu0 0
    %281 = vmatpush1.bf16.msra.mxu0 %v257
    %282 = vmatprep.subr.bf16.mxu0 0
    %283 = vmatpush1.bf16.msra.mxu0 0
    %284 = vmatprep.subr.bf16.mxu0 0
    %285 = vmatpush1.bf16.msra.mxu0 0
    %286 = vmatprep.subr.bf16.mxu0 0
    %287 = vmatpush1.bf16.msra.mxu0 0
    %288 = vmatprep.subr.bf16.mxu0 0
    %289 = vmatpush1.bf16.msra.mxu0 0
    %290 = vmatprep.subr.bf16.mxu0 0
    %291 = vmatpush1.bf16.msra.mxu0 0
    %292 = vmatprep.subr.bf16.mxu0 0
    %293 = vmatpush1.bf16.msra.mxu0 0
    %294 = vmatprep.subr.bf16.mxu0 0
    %295 = vmatpush1.bf16.msra.mxu0 0
    %296 = vmatprep.subr.bf16.mxu0 0
    %297 = vmatpush1.bf16.msra.mxu0 0
    %298 = vmatprep.mubr.bf16.mxu0 0
    %299 = vmatmul.mubr.bf16.gmra.mrb[0].mxu0 %v194
    %v300 = vpop.f32.mrb[0].mxu0
    %v301 = vadd.f32 %v216, %v300
    %v302 = vpop.f32.mrb[0].mxu0
    %v303 = vpop.f32.mrb[0].mxu0
    %v304 = vadd.f32 %v216, %v303
    %v305 = vpop.f32.mrb[0].mxu0
    %306 = vdwg.mxu0
    %v307 = vmul.f32 %v301, 0.01
    %v308 = vmul.f32 %v304, 0.01
    %v309 = vmax.f32 %v301, %v307
    %v310 = vmax.f32 %v304, %v308
    %v311 = vld [vmem:[%s5] sm:$0x1]
    %v313 = vlaneseq
    %v314 = vshrl.u32 %v313, 7
    %v315 = vsub.s32 0, %v314
    %v316 = vrot.slane %v311, %v315
    %v318 = vmul.f32 %v309, %v316
    %v319 = vmul.f32 %v310, %v316
    %320 = vadd.xlane.f32.xlu0 %v318
    %v321 = vpop.xlane.xlu0 %320
    %322 = vadd.xlane.f32.xlu0 %v319
    %v323 = vpop.xlane.xlu0 %322
    %s324 = sld [smem:[#allocation2]]
    %v325 = vstv %s324
    %v326 = vadd.f32 %v321, %v325
    %v327 = vadd.f32 %v323, %v325
    %v330 = vlaneseq
    %v331 = vand.u32 %v330, 127
    %v332 = vlaneseq
    %v333 = vshrl.u32 %v332, 7
    %v334 = vsub.s32 %v331, %v333
    %v335 = vrot.slane %v326, %v334
    %v336 = vadd.s32 %v331, 4294967288
    %v337 = vlaneseq
    %v338 = vshrl.u32 %v337, 7
    %v339 = vsub.s32 %v336, %v338
    %v340 = vrot.slane %v327, %v339
    %vm341 = vcmask 130112
    %v342 = vsel %vm341, %v340, %v335
    %vm344 = vcmask 122880
    %345 = vst.msk [vmem:[#allocation9] sm:$0x1] %vm344, %v342
    // Predicated region
    $region42: #{tpu_custom_call.1} parent=1 // pred_check
      _
    $region43: #{tpu_custom_call.1} parent=1 // pred_check_branch
      %347 = sbr.rel (0) target = $region45
    $region44: #{tpu_custom_call.1} parent=1 // pred_region
      %s349 = ssub.s32 16, 16
      %350 = vsyncadd [#allocation5], %s349
      %s352 = sshll.u32 [#allocation9], 4
      %s353 = int_to_ptr.vmem [resolvable:$true] %s352
      %355 = dma.vmem_to_hbm [thread:$0]  %s353, 16, %s7, [#allocation5]
    $region45: #{tpu_custom_call.1} parent=1 // pred_fallthru
      _
    // Predicated region
    $region46: #{tpu_custom_call.1} parent=1 // pred_check
      _
    $region47: #{tpu_custom_call.1} parent=1 // pred_check_branch
      %357 = sbr.rel (0) target = $region49
    $region48: #{tpu_custom_call.1} parent=1 // pred_region
      %358 = dma.done [#allocation5], 16
    $region49: #{tpu_custom_call.1} parent=1 // pred_fallthru
      _
    %359 = vsyncpa [#allocation4], 1
    %360 = vsyncpa [#allocation7], 1
    %361 = vsyncpa [#allocation5], 1

</llo_original>
